<compile_context>
chip_gen: v7x
topology: tpu7x:2x2x1
jax: 0.10.0
libtpu: 0.0.40
codegen_flags: <defaults>
</compile_context>

<pallas_src>
import math

import jax
import jax.numpy as jnp
from jax.experimental import pallas as pl
from jax.experimental.pallas import tpu as pltpu

# ----------------------------- problem sizes --------------------------------
B = 2                    # batch
N_OBJ, N_FEAT = 4, 6     # getout-style logic state: 4 objects x 6 features
D_LOGIC = N_OBJ * N_FEAT
D_NEURAL = N_OBJ * N_FEAT
D_IN = D_LOGIC + D_NEURAL
H_ACTOR = 32             # hidden width of the synthetic NSFR valuation head
NUM_ACTIONS = 5          # len(prednames)
H_CRITIC = 32            # MLPGetout hidden width

LANES = 128              # lane width of the packed output slab
LANES2 = 2 * LANES       # fused actor|critic slab width
LOGP_LANE = 8            # log_prob(action)      (evaluate) / greedy log_prob (act)
ENT_LANE = 9             # Categorical entropy   (evaluate)
VAL_LANE = 10            # critic state value    (evaluate)
ACT_LANE = 11            # greedy argmax action  (act, stored as f32)
TINY = 1e-30
MAX_BLK = 512            # row-block cap (raised from 128 per feedback)

_EVAL_PARAMS = ("ev_w1", "ev_b1", "ev_w2", "ev_b2", "ev_w3", "ev_b3")
_ACT_PARAMS = ("act_w1", "act_b1", "act_w2", "act_b2")
_VMEM = pl.BlockSpec(memory_space=pltpu.MemorySpace.VMEM)


# ------------------------------- fused kernels --------------------------------
def _evaluate_kernel(x_ref, a_ref,
                     w1_ref, b1_ref, w2_ref, b2_ref, w3_ref, b3_ref,
                     out_ref):
    """Block-diagonal actor|critic MLP + Categorical stats, one lane-dense slab."""
    rows = out_ref.shape[0]
    lane = jax.lax.broadcasted_iota(jnp.int32, (rows, LANES), 1)

    # fused layer 1 / layer 2: actor in lanes 0..127, critic in lanes 128..255
    h1 = jnp.maximum(jnp.dot(x_ref[...], w1_ref[...],
                             preferred_element_type=jnp.float32) + b1_ref[...], 0.0)
    z2 = jnp.dot(h1, w2_ref[...], preferred_element_type=jnp.float32) + b2_ref[...]

    logits = z2[:, :LANES]                       # actor predicate logits (pad lanes = 0)
    h2 = jnp.maximum(z2[:, LANES:], 0.0)         # critic hidden          (pad lanes = 0)

    # critic head: cw3 column pre-placed at VAL_LANE -> result lands in place
    val_slab = jnp.dot(h2, w3_ref[...], preferred_element_type=jnp.float32) + b3_ref[...]

    # Categorical(probs = sigmoid valuations, un-normalized) in log space
    valid = lane < NUM_ACTIONS
    p_raw = jnp.where(valid, 1.0 / (1.0 + jnp.exp(-logits)), 0.0)
    z = jnp.maximum(jnp.sum(p_raw, axis=-1, keepdims=True), TINY)        # (rows, 1)
    logp_all = jnp.log(jnp.maximum(p_raw, TINY)) - jnp.log(z)            # (rows, 128)
    a = a_ref[...]                                                       # (rows, 1) i32
    logp = jnp.sum(jnp.where(lane == a, logp_all, 0.0), axis=-1, keepdims=True)
    p_norm = p_raw * pl.reciprocal(z, approx=True)                       # EUP slot
    ent = -jnp.sum(p_norm * logp_all, axis=-1, keepdims=True)

    # additive lane packing (independent mul+adds, no dependent select chain)
    m_logp = (lane == LOGP_LANE).astype(jnp.float32)
    m_ent = (lane == ENT_LANE).astype(jnp.float32)
    out_ref[...] = p_raw + logp * m_logp + ent * m_ent + val_slab


def _act_kernel(xl_ref, w1_ref, b1_ref, w2_ref, b2_ref, out_ref):
    """Actor MLP + per-row greedy argmax (first max index) + its log_prob."""
    rows = out_ref.shape[0]
    lane = jax.lax.broadcasted_iota(jnp.int32, (rows, LANES), 1)
    lane_f = lane.astype(jnp.float32)
    valid = lane < NUM_ACTIONS

    h = jnp.maximum(jnp.dot(xl_ref[...], w1_ref[...],
                            preferred_element_type=jnp.float32) + b1_ref[...], 0.0)
    logits = jnp.dot(h, w2_ref[...], preferred_element_type=jnp.float32) + b2_ref[...]
    # exact sigmoid: greedy tie-breaking is not perturbed by approx reciprocal
    p_raw = jnp.where(valid, 1.0 / (1.0 + jnp.exp(-logits)), 0.0)

    # per-row greedy action: first lane achieving the row max (torch semantics)
    p_m = jnp.where(valid, p_raw, -jnp.inf)
    row_max = jnp.max(p_m, axis=-1, keepdims=True)
    amax_f = jnp.min(jnp.where(p_m >= row_max, lane_f, float(NUM_ACTIONS)),
                     axis=-1, keepdims=True)                             # (rows, 1)

    # log_prob of the greedy action under the normalized Categorical
    z = jnp.maximum(jnp.sum(p_raw, axis=-1, keepdims=True), TINY)
    logp_all = jnp.log(jnp.maximum(p_raw, TINY)) - jnp.log(z)
    sel = lane == amax_f.astype(jnp.int32)
    glogp = jnp.sum(jnp.where(sel, logp_all, 0.0), axis=-1, keepdims=True)

    m_act = (lane == ACT_LANE).astype(jnp.float32)
    m_logp = (lane == LOGP_LANE).astype(jnp.float32)
    out_ref[...] = p_raw + amax_f * m_act + glogp * m_logp


# ------------------------------ pallas wrappers -------------------------------
def _padded_rows(n):
    """Pad batch to a multiple of 8 sublanes (and of MAX_BLK when large)."""
    rows = max(8, -(-n // 8) * 8)
    if rows > MAX_BLK:
        rows = -(-rows // MAX_BLK) * MAX_BLK
    return rows


def _fused_evaluate_call(x, a2d, params):
    rows = x.shape[0]
    blk = min(rows, MAX_BLK)
    grid = (rows // blk,)

    def row_spec(width):
        return pl.BlockSpec((blk, width), lambda i: (i, 0))

    # constant index maps -> weights DMA'd once, VMEM-resident across all steps
    weight_specs = [pl.BlockSpec(params[k].shape, lambda i: (0, 0))
                    for k in _EVAL_PARAMS]
    return pl.pallas_call(
        _evaluate_kernel,
        grid=grid,
        in_specs=[row_spec(D_IN), row_spec(1)] + weight_specs,
        out_specs=row_spec(LANES),
        out_shape=jax.ShapeDtypeStruct((rows, LANES), jnp.float32),
        compiler_params=pltpu.CompilerParams(dimension_semantics=("parallel",)),
    )(x, a2d, *[params[k] for k in _EVAL_PARAMS])


def _fused_act_call(xl, params):
    rows = xl.shape[0]
    return pl.pallas_call(
        _act_kernel,
        out_shape=jax.ShapeDtypeStruct((rows, LANES), jnp.float32),
        in_specs=[_VMEM] * (1 + len(_ACT_PARAMS)),
        out_specs=_VMEM,
    )(xl, *[params[k] for k in _ACT_PARAMS])


# ------------------------------ jitted forward paths --------------------------
@jax.jit
def _evaluate_jit(params, neural_state, logic_state, action):
    b = logic_state.shape[0]
    xl = logic_state.reshape(b, -1).astype(jnp.float32)
    xn = neural_state.reshape(b, -1).astype(jnp.float32)
    x = jnp.concatenate([xl, xn], axis=-1)                       # (b, 48)
    rows = _padded_rows(b)
    x = jnp.pad(x, ((0, rows - b), (0, 0)))
    a2d = jnp.pad(action.astype(jnp.int32)[:, None], ((0, rows - b), (0, 0)))
    slab = _fused_evaluate_call(x, a2d, params)
    return (slab[:b, LOGP_LANE],                                 # action_logprobs (b,)
            slab[:b, VAL_LANE:VAL_LANE + 1],                     # state_values    (b, 1)
            slab[:b, ENT_LANE])                                  # dist_entropy    (b,)


@jax.jit
def _act_jit(params, logic_state, key, epsilon):
    b = logic_state.shape[0]
    xl = logic_state.reshape(b, -1).astype(jnp.float32)
    rows = _padded_rows(b)
    xl = jnp.pad(xl, ((0, rows - b), (0, 0)))
    slab = _fused_act_call(xl, params)
    row0 = slab[0]
    greedy_action = row0[ACT_LANE].astype(jnp.int32)
    greedy_logp = row0[LOGP_LANE]
    k_next, k_u, k_a = jax.random.split(key, 3)
    explore = jax.random.uniform(k_u) < epsilon
    rand_action = jax.random.randint(k_a, (), 0, NUM_ACTIONS, dtype=jnp.int32)
    uniform_logp = -jnp.log(jnp.float32(NUM_ACTIONS))
    action = jnp.where(explore, rand_action, greedy_action)
    logp = jnp.where(explore, uniform_logp, greedy_logp)
    return action, logp, k_next


# ------------------------------ the module ------------------------------------
class NSFRActorCriticPallas:
    """JAX/Pallas port of NSFR_ActorCritic (args.m == 'getout')."""

    def __init__(self, key, rng_key=None):
        self.num_actions = NUM_ACTIONS
        self._key = jax.random.PRNGKey(0) if rng_key is None else rng_key
        ks = jax.random.split(key, 5)

        def init(k, shape, fan_in):
            return jax.random.normal(k, shape, jnp.float32) / jnp.sqrt(float(fan_in))

        # raw (unpadded) parameters — also used by the pure-JAX reference
        aw1 = init(ks[0], (D_LOGIC, H_ACTOR), D_LOGIC)
        ab1 = jnp.zeros((1, H_ACTOR), jnp.float32)
        aw2 = init(ks[1], (H_ACTOR, NUM_ACTIONS), H_ACTOR)
        ab2 = jnp.zeros((1, NUM_ACTIONS), jnp.float32)
        cw1 = init(ks[2], (D_NEURAL, H_CRITIC), D_NEURAL)
        cb1 = jnp.zeros((1, H_CRITIC), jnp.float32)
        cw2 = init(ks[3], (H_CRITIC, H_CRITIC), H_CRITIC)
        cb2 = jnp.zeros((1, H_CRITIC), jnp.float32)
        cw3 = init(ks[4], (H_CRITIC, 1), H_CRITIC)
        cb3 = jnp.zeros((1, 1), jnp.float32)
        self.ref_params = dict(aw1=aw1, ab1=ab1, aw2=aw2, ab2=ab2, cw1=cw1,
                               cb1=cb1, cw2=cw2, cb2=cb2, cw3=cw3, cb3=cb3)

        # lane-dense padded / block-diagonal-fused kernel parameters
        def pad2(w, r, c):
            return jnp.pad(w, ((0, r - w.shape[0]), (0, c - w.shape[1])))

        aw1p, ab1p = pad2(aw1, D_LOGIC, LANES), pad2(ab1, 1, LANES)
        aw2p, ab2p = pad2(aw2, LANES, LANES), pad2(ab2, 1, LANES)
        cw1p, cb1p = pad2(cw1, D_NEURAL, LANES), pad2(cb1, 1, LANES)
        cw2p, cb2p = pad2(cw2, LANES, LANES), pad2(cb2, 1, LANES)

        w1f = (jnp.zeros((D_IN, LANES2), jnp.float32)
               .at[:D_LOGIC, :LANES].set(aw1p)
               .at[D_LOGIC:, LANES:].set(cw1p))
        b1f = jnp.concatenate([ab1p, cb1p], axis=-1)
        w2f = (jnp.zeros((LANES2, LANES2), jnp.float32)
               .at[:LANES, :LANES].set(aw2p)
               .at[LANES:, LANES:].set(cw2p))
        b2f = jnp.concatenate([ab2p, cb2p], axis=-1)
        # critic head column pre-placed at VAL_LANE (removes (32,1) matmul + repack)
        w3v = jnp.zeros((LANES, LANES), jnp.float32).at[:H_CRITIC, VAL_LANE].set(cw3[:, 0])
        b3v = jnp.zeros((1, LANES), jnp.float32).at[0, VAL_LANE].set(cb3[0, 0])

        self.params = dict(
            ev_w1=w1f, ev_b1=b1f, ev_w2=w2f, ev_b2=b2f, ev_w3=w3v, ev_b3=b3v,
            act_w1=aw1p, act_b1=ab1p, act_w2=aw2p, act_b2=ab2p)

    def act(self, logic_state, epsilon=0.0):
        # epsilon-greedy fully on-device (jax PRNG + select) -> one dispatch.
        action, logp, self._key = _act_jit(
            self.params, logic_state, self._key, jnp.float32(epsilon))
        return action, logp

    def evaluate(self, neural_state, logic_state, action):
        # For rollout training, flatten (T, B, ...) -> (T*B, ...) before calling:
        # one pallas_call amortizes launch + weight DMA across all timesteps.
        return _evaluate_jit(self.params, neural_state, logic_state, action)


# --------------------------- pure-JAX reference (demo check) -------------------
def _reference_probs(p, logic_state):
    x = logic_state.reshape(logic_state.shape[0], -1).astype(jnp.float32)
    h = jnp.maximum(x @ p["aw1"] + p["ab1"], 0.0)
    return jax.nn.sigmoid(h @ p["aw2"] + p["ab2"])


def _reference_evaluate(p, neural_state, logic_state, action):
    p_raw = _reference_probs(p, logic_state)
    pn = p_raw / p_raw.sum(-1, keepdims=True)
    logp_all = jnp.log(pn)
    logp = jnp.take_along_axis(logp_all, action[:, None].astype(jnp.int32), -1)[:, 0]
    ent = -(pn * logp_all).sum(-1)
    x = neural_state.reshape(neural_state.shape[0], -1).astype(jnp.float32)
    h1 = jnp.maximum(x @ p["cw1"] + p["cb1"], 0.0)
    h2 = jnp.maximum(h1 @ p["cw2"] + p["cb2"], 0.0)
    val = h2 @ p["cw3"] + p["cb3"]
    return logp, val, ent


# --------------------------------- demo ---------------------------------------
if __name__ == "__main__":
    key = jax.random.PRNGKey(0)
    k_param, k_logic, k_neural, k_act, k_step, k_big = jax.random.split(key, 6)

    model = NSFRActorCriticPallas(k_param, rng_key=k_step)

    logic_state = jax.random.uniform(k_logic, (B, N_OBJ, N_FEAT), jnp.float32)
    neural_state = jax.random.normal(k_neural, (B, N_OBJ, N_FEAT), jnp.float32)
    action = jax.random.randint(k_act, (B,), 0, NUM_ACTIONS, jnp.int32)

    # ---- evaluate path (single fused kernel, small batch) ----
    logprobs, values, entropy = model.evaluate(neural_state, logic_state, action)
    jax.block_until_ready((logprobs, values, entropy))
    assert logprobs.shape == (B,) and values.shape == (B, 1) and entropy.shape == (B,)
    ref_lp, ref_v, ref_e = _reference_evaluate(model.ref_params, neural_state,
                                               logic_state, action)
    assert jnp.allclose(logprobs, ref_lp, rtol=2e-2, atol=2e-2)
    assert jnp.allclose(values, ref_v, rtol=2e-2, atol=2e-2)
    assert jnp.allclose(entropy, ref_e, rtol=2e-2, atol=2e-2)

    # ---- evaluate path (flattened rollout: 1024 rows -> grid=(2,), blk=512) ----
    TB = 1024
    kb1, kb2, kb3 = jax.random.split(k_big, 3)
    big_logic = jax.random.uniform(kb1, (TB, N_OBJ, N_FEAT), jnp.float32)
    big_neural = jax.random.normal(kb2, (TB, N_OBJ, N_FEAT), jnp.float32)
    big_action = jax.random.randint(kb3, (TB,), 0, NUM_ACTIONS, jnp.int32)
    blp, bv, be = model.evaluate(big_neural, big_logic, big_action)
    jax.block_until_ready((blp, bv, be))
    rlp, rv, re = _reference_evaluate(model.ref_params, big_neural, big_logic, big_action)
    assert jnp.allclose(blp, rlp, rtol=2e-2, atol=2e-2)
    assert jnp.allclose(bv, rv, rtol=2e-2, atol=2e-2)
    assert jnp.allclose(be, re, rtol=2e-2, atol=2e-2)

    # ---- act path (greedy, single fused kernel + on-device select) ----
    a_greedy, lp_greedy = model.act(logic_state, epsilon=0.0)
    jax.block_until_ready((a_greedy, lp_greedy))
    assert a_greedy.shape == () and lp_greedy.shape == ()
    ref_p = _reference_probs(model.ref_params, logic_state)
    assert float(ref_p[0, int(a_greedy)]) >= float(ref_p[0].max()) - 1e-3
    ref_p_norm0 = ref_p[0] / ref_p[0].sum()
    assert abs(float(lp_greedy) - float(jnp.log(ref_p_norm0[int(a_greedy)]))) < 2e-2

    # ---- act path (exploration branch, on-device PRNG) ----
    a_exp, lp_exp = model.act(logic_state, epsilon=1.0)
    jax.block_until_ready((a_exp, lp_exp))
    assert 0 <= int(a_exp) < NUM_ACTIONS
    assert abs(float(lp_exp) + math.log(NUM_ACTIONS)) < 1e-5

    print("KERNEL_OK")
</pallas_src>

<mosaic_0001>
module attributes {stable_mosaic.version = 11 : i64} {
  func.func @_evaluate_kernel(%arg0: i32, %arg1: memref<8x48xf32, #tpu.memory_space<vmem>>, %arg2: memref<8x1xi32, #tpu.memory_space<vmem>>, %arg3: memref<48x256xf32, #tpu.memory_space<vmem>>, %arg4: memref<1x256xf32, #tpu.memory_space<vmem>>, %arg5: memref<256x256xf32, #tpu.memory_space<vmem>>, %arg6: memref<1x256xf32, #tpu.memory_space<vmem>>, %arg7: memref<128x128xf32, #tpu.memory_space<vmem>>, %arg8: memref<1x128xf32, #tpu.memory_space<vmem>>, %arg9: memref<8x128xf32, #tpu.memory_space<vmem>>) attributes {dimension_semantics = [#tpu.dimension_semantics<parallel>], iteration_bounds = array<i64: 1>, scalar_prefetch = 0 : i64, scratch_operands = 0 : i64, tpu.core_type = #tpu.core_type<tc>, window_params = [{transform_indices = @transform_0, window_bounds = array<i64: 8, 48>}, {transform_indices = @transform_1, window_bounds = array<i64: 8, 1>}, {pipeline_mode = #tpu.pipeline_mode<synchronous>, transform_indices = @transform_2, window_bounds = array<i64: 48, 256>}, {pipeline_mode = #tpu.pipeline_mode<synchronous>, transform_indices = @transform_3, window_bounds = array<i64: 1, 256>}, {pipeline_mode = #tpu.pipeline_mode<synchronous>, transform_indices = @transform_4, window_bounds = array<i64: 256, 256>}, {pipeline_mode = #tpu.pipeline_mode<synchronous>, transform_indices = @transform_5, window_bounds = array<i64: 1, 256>}, {pipeline_mode = #tpu.pipeline_mode<synchronous>, transform_indices = @transform_6, window_bounds = array<i64: 128, 128>}, {pipeline_mode = #tpu.pipeline_mode<synchronous>, transform_indices = @transform_7, window_bounds = array<i64: 1, 128>}, {transform_indices = @transform_8, window_bounds = array<i64: 8, 128>}]} {
    %0 = tpu.iota {dimensions = array<i32: 1>} : vector<8x128xi32>
    %c0 = arith.constant 0 : index
    %c0_0 = arith.constant 0 : index
    %1 = vector.load %arg1[%c0, %c0_0] : memref<8x48xf32, #tpu.memory_space<vmem>>, vector<8x48xf32>
    %c0_1 = arith.constant 0 : index
    %c0_2 = arith.constant 0 : index
    %2 = vector.load %arg3[%c0_1, %c0_2] : memref<48x256xf32, #tpu.memory_space<vmem>>, vector<48x256xf32>
    %cst = arith.constant dense<0.000000e+00> : vector<8x256xf32>
    %3 = tpu.matmul %1, %2, %cst {dimension_numbers = #tpu.dot_dimension_numbers<[1], [0], [0], [1], [0, 0, 1, 1], [], []>} : vector<8x48xf32>, vector<48x256xf32>, vector<8x256xf32> -> vector<8x256xf32>
    %c0_3 = arith.constant 0 : index
    %c0_4 = arith.constant 0 : index
    %4 = vector.load %arg4[%c0_3, %c0_4] : memref<1x256xf32, #tpu.memory_space<vmem>>, vector<1x256xf32>
    %5 = vector.broadcast %4 : vector<1x256xf32> to vector<8x256xf32>
    %6 = arith.addf %3, %5 : vector<8x256xf32>
    %cst_5 = arith.constant 0.000000e+00 : f32
    %7 = vector.broadcast %cst_5 : f32 to vector<8x256xf32>
    %8 = arith.maximumf %6, %7 : vector<8x256xf32>
    %c0_6 = arith.constant 0 : index
    %c0_7 = arith.constant 0 : index
    %9 = vector.load %arg5[%c0_6, %c0_7] : memref<256x256xf32, #tpu.memory_space<vmem>>, vector<256x256xf32>
    %cst_8 = arith.constant dense<0.000000e+00> : vector<8x256xf32>
    %10 = tpu.matmul %8, %9, %cst_8 {dimension_numbers = #tpu.dot_dimension_numbers<[1], [0], [0], [1], [0, 0, 1, 1], [], []>} : vector<8x256xf32>, vector<256x256xf32>, vector<8x256xf32> -> vector<8x256xf32>
    %c0_9 = arith.constant 0 : index
    %c0_10 = arith.constant 0 : index
    %11 = vector.load %arg6[%c0_9, %c0_10] : memref<1x256xf32, #tpu.memory_space<vmem>>, vector<1x256xf32>
    %12 = vector.broadcast %11 : vector<1x256xf32> to vector<8x256xf32>
    %13 = arith.addf %10, %12 : vector<8x256xf32>
    %14 = vector.extract_strided_slice %13 {offsets = [0, 0], sizes = [8, 128], strides = [1, 1]} : vector<8x256xf32> to vector<8x128xf32>
    %15 = vector.extract_strided_slice %13 {offsets = [0, 128], sizes = [8, 128], strides = [1, 1]} : vector<8x256xf32> to vector<8x128xf32>
    %cst_11 = arith.constant 0.000000e+00 : f32
    %16 = vector.broadcast %cst_11 : f32 to vector<8x128xf32>
    %17 = arith.maximumf %15, %16 : vector<8x128xf32>
    %c0_12 = arith.constant 0 : index
    %c0_13 = arith.constant 0 : index
    %18 = vector.load %arg7[%c0_12, %c0_13] : memref<128x128xf32, #tpu.memory_space<vmem>>, vector<128x128xf32>
    %cst_14 = arith.constant dense<0.000000e+00> : vector<8x128xf32>
    %19 = tpu.matmul %17, %18, %cst_14 {dimension_numbers = #tpu.dot_dimension_numbers<[1], [0], [0], [1], [0, 0, 1, 1], [], []>} : vector<8x128xf32>, vector<128x128xf32>, vector<8x128xf32> -> vector<8x128xf32>
    %c0_15 = arith.constant 0 : index
    %c0_16 = arith.constant 0 : index
    %20 = vector.load %arg8[%c0_15, %c0_16] : memref<1x128xf32, #tpu.memory_space<vmem>>, vector<1x128xf32>
    %21 = vector.broadcast %20 : vector<1x128xf32> to vector<8x128xf32>
    %22 = arith.addf %19, %21 : vector<8x128xf32>
    %c5_i32 = arith.constant 5 : i32
    %23 = vector.broadcast %c5_i32 : i32 to vector<8x128xi32>
    %24 = arith.cmpi slt, %0, %23 : vector<8x128xi32>
    %cst_17 = arith.constant 0.000000e+00 : f32
    %25 = vector.broadcast %cst_17 : f32 to vector<8x128xf32>
    %26 = arith.subf %25, %14 : vector<8x128xf32>
    %27 = math.exp %26 : vector<8x128xf32>
    %cst_18 = arith.constant 1.000000e+00 : f32
    %28 = vector.broadcast %cst_18 : f32 to vector<8x128xf32>
    %29 = arith.addf %28, %27 : vector<8x128xf32>
    %cst_19 = arith.constant 1.000000e+00 : f32
    %30 = vector.broadcast %cst_19 : f32 to vector<8x128xf32>
    %31 = arith.divf %30, %29 : vector<8x128xf32>
    %cst_20 = arith.constant 0.000000e+00 : f32
    %32 = vector.broadcast %cst_20 : f32 to vector<8x128xf32>
    %33 = arith.select %24, %31, %32 : vector<8x128xi1>, vector<8x128xf32>
    %cst_21 = arith.constant dense<0.000000e+00> : vector<8xf32>
    %34 = vector.multi_reduction <add>, %33, %cst_21 [1] : vector<8x128xf32> to vector<8xf32>
    %35 = vector.shape_cast %34 : vector<8xf32> to vector<8x1xf32>
    %cst_22 = arith.constant 1.000000e-30 : f32
    %36 = vector.broadcast %cst_22 : f32 to vector<8x1xf32>
    %37 = arith.maximumf %35, %36 : vector<8x1xf32>
    %cst_23 = arith.constant 1.000000e-30 : f32
    %38 = vector.broadcast %cst_23 : f32 to vector<8x128xf32>
    %39 = arith.maximumf %33, %38 : vector<8x128xf32>
    %40 = math.log %39 : vector<8x128xf32>
    %41 = math.log %37 : vector<8x1xf32>
    %42 = vector.broadcast %41 : vector<8x1xf32> to vector<8x128xf32>
    %43 = arith.subf %40, %42 : vector<8x128xf32>
    %c0_24 = arith.constant 0 : index
    %c0_25 = arith.constant 0 : index
    %44 = vector.load %arg2[%c0_24, %c0_25] : memref<8x1xi32, #tpu.memory_space<vmem>>, vector<8x1xi32>
    %45 = vector.broadcast %44 : vector<8x1xi32> to vector<8x128xi32>
    %46 = arith.cmpi eq, %0, %45 : vector<8x128xi32>
    %cst_26 = arith.constant 0.000000e+00 : f32
    %47 = vector.broadcast %cst_26 : f32 to vector<8x128xf32>
    %48 = arith.select %46, %43, %47 : vector<8x128xi1>, vector<8x128xf32>
    %cst_27 = arith.constant dense<0.000000e+00> : vector<8xf32>
    %49 = vector.multi_reduction <add>, %48, %cst_27 [1] : vector<8x128xf32> to vector<8xf32>
    %50 = vector.shape_cast %49 : vector<8xf32> to vector<8x1xf32>
    %51 = tpu.reciprocal %37 {approx = true} : vector<8x1xf32> -> vector<8x1xf32>
    %52 = vector.broadcast %51 : vector<8x1xf32> to vector<8x128xf32>
    %53 = arith.mulf %33, %52 : vector<8x128xf32>
    %54 = arith.mulf %53, %43 : vector<8x128xf32>
    %cst_28 = arith.constant dense<0.000000e+00> : vector<8xf32>
    %55 = vector.multi_reduction <add>, %54, %cst_28 [1] : vector<8x128xf32> to vector<8xf32>
    %56 = vector.shape_cast %55 : vector<8xf32> to vector<8x1xf32>
    %cst_29 = arith.constant 0.000000e+00 : f32
    %57 = vector.broadcast %cst_29 : f32 to vector<8x1xf32>
    %58 = arith.subf %57, %56 : vector<8x1xf32>
    %c8_i32 = arith.constant 8 : i32
    %59 = vector.broadcast %c8_i32 : i32 to vector<8x128xi32>
    %60 = arith.cmpi eq, %0, %59 : vector<8x128xi32>
    %61 = arith.extui %60 : vector<8x128xi1> to vector<8x128xi32>
    %62 = arith.sitofp %61 : vector<8x128xi32> to vector<8x128xf32>
    %c9_i32 = arith.constant 9 : i32
    %63 = vector.broadcast %c9_i32 : i32 to vector<8x128xi32>
    %64 = arith.cmpi eq, %0, %63 : vector<8x128xi32>
    %65 = arith.extui %64 : vector<8x128xi1> to vector<8x128xi32>
    %66 = arith.sitofp %65 : vector<8x128xi32> to vector<8x128xf32>
    %67 = vector.broadcast %50 : vector<8x1xf32> to vector<8x128xf32>
    %68 = arith.mulf %67, %62 : vector<8x128xf32>
    %69 = arith.addf %33, %68 : vector<8x128xf32>
    %70 = vector.broadcast %58 : vector<8x1xf32> to vector<8x128xf32>
    %71 = arith.mulf %70, %66 : vector<8x128xf32>
    %72 = arith.addf %69, %71 : vector<8x128xf32>
    %73 = arith.addf %72, %22 : vector<8x128xf32>
    %c0_30 = arith.constant 0 : index
    %c0_31 = arith.constant 0 : index
    %74 = vector.load %arg9[%c0_30, %c0_31] : memref<8x128xf32, #tpu.memory_space<vmem>>, vector<8x128xf32>
    tpu.vector_store %arg9[%c0_30, %c0_31], %73 {strides = array<i32>} : memref<8x128xf32, #tpu.memory_space<vmem>>, vector<8x128xf32>,
    return
  }
  func.func @transform_0(%arg0: i32) -> (i32, i32) {
    %c0_i32 = arith.constant 0 : i32
    %c0_i32_0 = arith.constant 0 : i32
    return %arg0, %c0_i32 : i32, i32
  }
  func.func @transform_1(%arg0: i32) -> (i32, i32) {
    %c0_i32 = arith.constant 0 : i32
    %c0_i32_0 = arith.constant 0 : i32
    return %arg0, %c0_i32 : i32, i32
  }
  func.func @transform_2(%arg0: i32) -> (i32, i32) {
    %c0_i32 = arith.constant 0 : i32
    %c0_i32_0 = arith.constant 0 : i32
    %c0_i32_1 = arith.constant 0 : i32
    return %c0_i32, %c0_i32_0 : i32, i32
  }
  func.func @transform_3(%arg0: i32) -> (i32, i32) {
    %c0_i32 = arith.constant 0 : i32
    %c0_i32_0 = arith.constant 0 : i32
    %c0_i32_1 = arith.constant 0 : i32
    return %c0_i32, %c0_i32_0 : i32, i32
  }
  func.func @transform_4(%arg0: i32) -> (i32, i32) {
    %c0_i32 = arith.constant 0 : i32
    %c0_i32_0 = arith.constant 0 : i32
    %c0_i32_1 = arith.constant 0 : i32
    return %c0_i32, %c0_i32_0 : i32, i32
  }
  func.func @transform_5(%arg0: i32) -> (i32, i32) {
    %c0_i32 = arith.constant 0 : i32
    %c0_i32_0 = arith.constant 0 : i32
    %c0_i32_1 = arith.constant 0 : i32
    return %c0_i32, %c0_i32_0 : i32, i32
  }
  func.func @transform_6(%arg0: i32) -> (i32, i32) {
    %c0_i32 = arith.constant 0 : i32
    %c0_i32_0 = arith.constant 0 : i32
    %c0_i32_1 = arith.constant 0 : i32
    return %c0_i32, %c0_i32_0 : i32, i32
  }
  func.func @transform_7(%arg0: i32) -> (i32, i32) {
    %c0_i32 = arith.constant 0 : i32
    %c0_i32_0 = arith.constant 0 : i32
    %c0_i32_1 = arith.constant 0 : i32
    return %c0_i32, %c0_i32_0 : i32, i32
  }
  func.func @transform_8(%arg0: i32) -> (i32, i32) {
    %c0_i32 = arith.constant 0 : i32
    %c0_i32_0 = arith.constant 0 : i32
    return %arg0, %c0_i32 : i32, i32
  }
}

</mosaic_0001>

<llo_original>
// kernel: _evaluate_jit.1
$region0: #{_evaluate_jit.1}
  #allocation0 [shape = 'u32[]', space=smem, size = 0x4, offset = 0x4, fixed_abs, tag = 'smem constant byte address 0x4 - core index']
  #allocation1 [shape = 'u32[144,128]{1,0:T(1,128)}', space=vmem, size = 0x12000, scoped, tag = 'internal scratch']
  %s0 = inlined_call_operand.vmem [shape: f32[8,48], index: 0, kind: input, shape index: {}]
  %s1 = inlined_call_operand.vmem [shape: s32[8,1], index: 1, kind: input, shape index: {}]
  %s2 = inlined_call_operand.hbm [shape: f32[48,256], index: 2, kind: input, shape index: {}]
  %s3 = inlined_call_operand.vmem [shape: f32[1,256], index: 3, kind: input, shape index: {}]
  %s4 = inlined_call_operand.hbm [shape: f32[256,256], index: 4, kind: input, shape index: {}]
  %s5 = inlined_call_operand.vmem [shape: f32[1,256], index: 5, kind: input, shape index: {}]
  %s6 = inlined_call_operand.hbm [shape: f32[128,128], index: 6, kind: input, shape index: {}]
  %s7 = inlined_call_operand.vmem [shape: f32[1,128], index: 7, kind: input, shape index: {}]
  %s8 = inlined_call_operand.vmem [shape: f32[8,128], index: 8, kind: output, shape index: {}]
  %s9 = sld [smem:[#allocation0]]
  $region54: #{_evaluate_jit.1} parent=0
    _
  %s11 = ssub.s32 1, %s9
  %s12 = scalar_select 0, %s11, %s9
  $region1: #{_evaluate_jit.1} parent=0
    #allocation2 [shape = 'u8[49152]{0}', space=vmem, size = 0xc000, scoped, tag = 'input window, operand 2, single buffered']
    #allocation3 [shape = 's32[1]{0}', space=sflag, size = 0x4, scoped, tag = 'scoped memory for _evaluate_jit.1']
    #allocation4 [shape = 'u8[262144]{0}', space=vmem, size = 0x40000, scoped, tag = 'input window, operand 4, single buffered']
    #allocation5 [shape = 's32[1]{0}', space=sflag, size = 0x4, scoped, tag = 'scoped memory for _evaluate_jit.1']
    #allocation6 [shape = 'u8[65536]{0}', space=vmem, size = 0x10000, scoped, tag = 'input window, operand 6, single buffered']
    %13 = vsyncpa [#allocation3], 0
    %14 = vsyncpa [#allocation5], 0
    // Predicated region
    $region2: #{_evaluate_jit.1} parent=1 // pred_check
      _
    $region3: #{_evaluate_jit.1} parent=1 // pred_check_branch
      %16 = sbr.rel (0) target = $region5
    $region4: #{_evaluate_jit.1} parent=1 // pred_region
      _
    $region5: #{_evaluate_jit.1} parent=1 // pred_fallthru
      _
    // Predicated region
    $region6: #{_evaluate_jit.1} parent=1 // pred_check
      _
    $region7: #{_evaluate_jit.1} parent=1 // pred_check_branch
      %18 = sbr.rel (0) target = $region9
    $region8: #{_evaluate_jit.1} parent=1 // pred_region
      _
    $region9: #{_evaluate_jit.1} parent=1 // pred_fallthru
      _
    // Predicated region
    $region10: #{_evaluate_jit.1} parent=1 // pred_check
      _
    $region11: #{_evaluate_jit.1} parent=1 // pred_check_branch
      %20 = sbr.rel (0) target = $region13
    $region12: #{_evaluate_jit.1} parent=1 // pred_region
      %s22 = ssub.s32 1536, 1536
      %23 = vsyncadd [#allocation3], %s22
      %s24 = sshll.u32 [#allocation2], 4
      %s25 = int_to_ptr.vmem [resolvable:$true] %s24
      %30 = dma.hbm_to_vmem [thread:$0]  %s2, 1536, %s25, [#allocation3], 256, 256, 16
    $region13: #{_evaluate_jit.1} parent=1 // pred_fallthru
      _
    // Predicated region
    $region14: #{_evaluate_jit.1} parent=1 // pred_check
      _
    $region15: #{_evaluate_jit.1} parent=1 // pred_check_branch
      %32 = sbr.rel (0) target = $region17
    $region16: #{_evaluate_jit.1} parent=1 // pred_region
      _
    $region17: #{_evaluate_jit.1} parent=1 // pred_fallthru
      _
    // Predicated region
    $region18: #{_evaluate_jit.1} parent=1 // pred_check
      _
    $region19: #{_evaluate_jit.1} parent=1 // pred_check_branch
      %34 = sbr.rel (0) target = $region21
    $region20: #{_evaluate_jit.1} parent=1 // pred_region
      %s36 = ssub.s32 8192, 8192
      %37 = vsyncadd [#allocation5], %s36
      %s38 = sshll.u32 [#allocation4], 4
      %s39 = int_to_ptr.vmem [resolvable:$true] %s38
      %44 = dma.hbm_to_vmem [thread:$0]  %s4, 8192, %s39, [#allocation5], 256, 256, 16
    $region21: #{_evaluate_jit.1} parent=1 // pred_fallthru
      _
    // Predicated region
    $region22: #{_evaluate_jit.1} parent=1 // pred_check
      _
    $region23: #{_evaluate_jit.1} parent=1 // pred_check_branch
      %46 = sbr.rel (0) target = $region25
    $region24: #{_evaluate_jit.1} parent=1 // pred_region
      _
    $region25: #{_evaluate_jit.1} parent=1 // pred_fallthru
      _
    // Predicated region
    $region26: #{_evaluate_jit.1} parent=1 // pred_check
      _
    $region27: #{_evaluate_jit.1} parent=1 // pred_check_branch
      %48 = sbr.rel (0) target = $region29
    $region28: #{_evaluate_jit.1} parent=1 // pred_region
      %s50 = ssub.s32 2048, 2048
      %51 = vsyncadd [#allocation5], %s50
      %s52 = sshll.u32 [#allocation6], 4
      %s53 = int_to_ptr.vmem [resolvable:$true] %s52
      %58 = dma.hbm_to_vmem [thread:$0]  %s6, 2048, %s53, [#allocation5], 128, 128, 8
    $region29: #{_evaluate_jit.1} parent=1 // pred_fallthru
      _
    // Predicated region
    $region30: #{_evaluate_jit.1} parent=1 // pred_check
      _
    $region31: #{_evaluate_jit.1} parent=1 // pred_check_branch
      %60 = sbr.rel (0) target = $region33
    $region32: #{_evaluate_jit.1} parent=1 // pred_region
      _
    $region33: #{_evaluate_jit.1} parent=1 // pred_fallthru
      _
    // Predicated region
    $region34: #{_evaluate_jit.1} parent=1 // pred_check
      _
    $region35: #{_evaluate_jit.1} parent=1 // pred_check_branch
      %62 = sbr.rel (0) target = $region37
    $region36: #{_evaluate_jit.1} parent=1 // pred_region
      %63 = dma.done [#allocation3], 1536
    $region37: #{_evaluate_jit.1} parent=1 // pred_fallthru
      _
    // Predicated region
    $region38: #{_evaluate_jit.1} parent=1 // pred_check
      _
    $region39: #{_evaluate_jit.1} parent=1 // pred_check_branch
      %65 = sbr.rel (0) target = $region41
    $region40: #{_evaluate_jit.1} parent=1 // pred_region
      %66 = dma.done [#allocation5], 8192
    $region41: #{_evaluate_jit.1} parent=1 // pred_fallthru
      _
    // Predicated region
    $region42: #{_evaluate_jit.1} parent=1 // pred_check
      _
    $region43: #{_evaluate_jit.1} parent=1 // pred_check_branch
      %68 = sbr.rel (0) target = $region45
    $region44: #{_evaluate_jit.1} parent=1 // pred_region
      %69 = dma.done [#allocation5], 2048
    $region45: #{_evaluate_jit.1} parent=1 // pred_fallthru
      _
    %v70 = vlaneseq
    %v71 = vand.u32 %v70, 127
    %v72 = vld [vmem:[%s0] sm:$0xff]
    %v73 = vld [vmem:[#allocation2] sm:$0xff]
    %v74 = vld [vmem:[#allocation2 + $0x8] sm:$0xff]
    %v75 = vld [vmem:[#allocation2 + $0x10] sm:$0xff]
    %v76 = vld [vmem:[#allocation2 + $0x18] sm:$0xff]
    %v77 = vld [vmem:[#allocation2 + $0x20] sm:$0xff]
    %v78 = vld [vmem:[#allocation2 + $0x28] sm:$0xff]
    %v79 = vld [vmem:[#allocation2 + $0x30] sm:$0xff]
    %v80 = vld [vmem:[#allocation2 + $0x38] sm:$0xff]
    %v81 = vld [vmem:[#allocation2 + $0x40] sm:$0xff]
    %v82 = vld [vmem:[#allocation2 + $0x48] sm:$0xff]
    %v83 = vld [vmem:[#allocation2 + $0x50] sm:$0xff]
    %v84 = vld [vmem:[#allocation2 + $0x58] sm:$0xff]
    %v85 = vld [vmem:[%s3] sm:$0x3]
    %v87 = vlaneseq
    %v88 = vshrl.u32 %v87, 7
    %v89 = vsub.s32 0, %v88
    %v90 = vrot.slane %v85, %v89
    %v91 = vlaneseq
    %v92 = vshrl.u32 %v91, 7
    %v93 = vsub.s32 1, %v92
    %v94 = vrot.slane %v85, %v93
    %vm97 = vcmask 392192
    %v99 = vsel %vm97, %v72, 0
    %101 = vmatprep.subr.mxu0 %v74
    %102 = vmatpush1.msra.mxu0 %v73
    %103 = vmatprep.subr.mxu0 %v76
    %104 = vmatpush1.msra.mxu0 %v75
    %105 = vmatprep.subr.mxu0 %v78
    %106 = vmatpush1.msra.mxu0 %v77
    %107 = vmatprep.subr.mxu0 %v80
    %108 = vmatpush1.msra.mxu0 %v79
    %109 = vmatprep.subr.mxu0 %v82
    %110 = vmatpush1.msra.mxu0 %v81
    %111 = vmatprep.subr.mxu0 %v84
    %112 = vmatpush1.msra.mxu0 %v83
    %113 = vmatprep.subr.mxu0 0.0
    %114 = vmatpush1.msra.mxu0 0.0
    %115 = vmatprep.subr.mxu0 0.0
    %116 = vmatpush1.msra.mxu0 0.0
    %117 = vmatprep.subr.mxu0 0.0
    %118 = vmatpush1.msra.mxu0 0.0
    %119 = vmatprep.subr.mxu0 0.0
    %120 = vmatpush1.msra.mxu0 0.0
    %121 = vmatprep.subr.mxu0 0.0
    %122 = vmatpush1.msra.mxu0 0.0
    %123 = vmatprep.subr.mxu0 0.0
    %124 = vmatpush1.msra.mxu0 0.0
    %125 = vmatprep.subr.mxu0 0.0
    %126 = vmatpush1.msra.mxu0 0.0
    %127 = vmatprep.subr.mxu0 0.0
    %128 = vmatpush1.msra.mxu0 0.0
    %129 = vmatprep.subr.mxu0 0.0
    %130 = vmatpush1.msra.mxu0 0.0
    %131 = vmatprep.subr.mxu0 0.0
    %132 = vmatpush1.msra.mxu0 0.0
    %133 = vmatprep.subr.mxu0 0.0
    %134 = vmatpush1.msra.mxu0 0.0
    %135 = vmatprep.subr.mxu0 0.0
    %136 = vmatpush1.msra.mxu0 0.0
    %137 = vmatprep.subr.mxu0 0.0
    %138 = vmatpush1.msra.mxu0 0.0
    %139 = vmatprep.subr.mxu0 0.0
    %140 = vmatpush1.msra.mxu0 0.0
    %141 = vmatprep.subr.mxu0 0.0
    %142 = vmatpush1.msra.mxu0 0.0
    %143 = vmatprep.subr.mxu0 0.0
    %144 = vmatpush1.msra.mxu0 0.0
    %145 = vmatprep.subr.mxu0 0.0
    %146 = vmatpush1.msra.mxu0 0.0
    %147 = vmatprep.subr.mxu0 0.0
    %148 = vmatpush1.msra.mxu0 0.0
    %149 = vmatprep.subr.mxu0 0.0
    %150 = vmatpush1.msra.mxu0 0.0
    %151 = vmatprep.subr.mxu0 0.0
    %152 = vmatpush1.msra.mxu0 0.0
    %153 = vmatprep.subr.mxu0 0.0
    %154 = vmatpush1.msra.mxu0 0.0
    %155 = vmatprep.subr.mxu0 0.0
    %156 = vmatpush1.msra.mxu0 0.0
    %157 = vmatprep.subr.mxu0 0.0
    %158 = vmatpush1.msra.mxu0 0.0
    %159 = vmatprep.subr.mxu0 0.0
    %160 = vmatpush1.msra.mxu0 0.0
    %161 = vmatprep.subr.mxu0 0.0
    %162 = vmatpush1.msra.mxu0 0.0
    %163 = vmatprep.subr.mxu0 0.0
    %164 = vmatpush1.msra.mxu0 0.0
    %165 = vmatprep.mubr.f32.mxu0 0.0
    %166 = vmatmul.mubr.f32.gmra.mrb[0].mxu0 %v99
    %v167 = vpop.f32.mrb[0].mxu0
    %v168 = vadd.f32 %v90, %v167
    %v169 = vpop.f32.mrb[0].mxu0
    %v170 = vadd.f32 %v94, %v169
    %171 = vdwg.mxu0
    %v172 = vmax.f32 %v168, 0.0
    %v173 = vmax.f32 %v170, 0.0
    %v174 = vld [vmem:[#allocation4] sm:$0xff]
    %v175 = vld [vmem:[#allocation4 + $0x8] sm:$0xff]
    %v176 = vld [vmem:[#allocation4 + $0x10] sm:$0xff]
    %v177 = vld [vmem:[#allocation4 + $0x18] sm:$0xff]
    %v178 = vld [vmem:[#allocation4 + $0x20] sm:$0xff]
    %v179 = vld [vmem:[#allocation4 + $0x28] sm:$0xff]
    %v180 = vld [vmem:[#allocation4 + $0x30] sm:$0xff]
    %v181 = vld [vmem:[#allocation4 + $0x38] sm:$0xff]
    %v182 = vld [vmem:[#allocation4 + $0x40] sm:$0xff]
    %v183 = vld [vmem:[#allocation4 + $0x48] sm:$0xff]
    %v184 = vld [vmem:[#allocation4 + $0x50] sm:$0xff]
    %v185 = vld [vmem:[#allocation4 + $0x58] sm:$0xff]
    %v186 = vld [vmem:[#allocation4 + $0x60] sm:$0xff]
    %v187 = vld [vmem:[#allocation4 + $0x68] sm:$0xff]
    %v188 = vld [vmem:[#allocation4 + $0x70] sm:$0xff]
    %v189 = vld [vmem:[#allocation4 + $0x78] sm:$0xff]
    %v190 = vld [vmem:[#allocation4 + $0x80] sm:$0xff]
    %v191 = vld [vmem:[#allocation4 + $0x88] sm:$0xff]
    %v192 = vld [vmem:[#allocation4 + $0x90] sm:$0xff]
    %v193 = vld [vmem:[#allocation4 + $0x98] sm:$0xff]
    %v194 = vld [vmem:[#allocation4 + $0xa0] sm:$0xff]
    %v195 = vld [vmem:[#allocation4 + $0xa8] sm:$0xff]
    %v196 = vld [vmem:[#allocation4 + $0xb0] sm:$0xff]
    %v197 = vld [vmem:[#allocation4 + $0xb8] sm:$0xff]
    %v198 = vld [vmem:[#allocation4 + $0xc0] sm:$0xff]
    %v199 = vld [vmem:[#allocation4 + $0xc8] sm:$0xff]
    %v200 = vld [vmem:[#allocation4 + $0xd0] sm:$0xff]
    %v201 = vld [vmem:[#allocation4 + $0xd8] sm:$0xff]
    %v202 = vld [vmem:[#allocation4 + $0xe0] sm:$0xff]
    %v203 = vld [vmem:[#allocation4 + $0xe8] sm:$0xff]
    %v204 = vld [vmem:[#allocation4 + $0xf0] sm:$0xff]
    %v205 = vld [vmem:[#allocation4 + $0xf8] sm:$0xff]
    %v206 = vld [vmem:[#allocation4 + $0x100] sm:$0xff]
    %v207 = vld [vmem:[#allocation4 + $0x108] sm:$0xff]
    %v208 = vld [vmem:[#allocation4 + $0x110] sm:$0xff]
    %v209 = vld [vmem:[#allocation4 + $0x118] sm:$0xff]
    %v210 = vld [vmem:[#allocation4 + $0x120] sm:$0xff]
    %v211 = vld [vmem:[#allocation4 + $0x128] sm:$0xff]
    %v212 = vld [vmem:[#allocation4 + $0x130] sm:$0xff]
    %v213 = vld [vmem:[#allocation4 + $0x138] sm:$0xff]
    %v214 = vld [vmem:[#allocation4 + $0x140] sm:$0xff]
    %v215 = vld [vmem:[#allocation4 + $0x148] sm:$0xff]
    %v216 = vld [vmem:[#allocation4 + $0x150] sm:$0xff]
    %v217 = vld [vmem:[#allocation4 + $0x158] sm:$0xff]
    %v218 = vld [vmem:[#allocation4 + $0x160] sm:$0xff]
    %v219 = vld [vmem:[#allocation4 + $0x168] sm:$0xff]
    %v220 = vld [vmem:[#allocation4 + $0x170] sm:$0xff]
    %v221 = vld [vmem:[#allocation4 + $0x178] sm:$0xff]
    %v222 = vld [vmem:[#allocation4 + $0x180] sm:$0xff]
    %v223 = vld [vmem:[#allocation4 + $0x188] sm:$0xff]
    %v224 = vld [vmem:[#allocation4 + $0x190] sm:$0xff]
    %v225 = vld [vmem:[#allocation4 + $0x198] sm:$0xff]
    %v226 = vld [vmem:[#allocation4 + $0x1a0] sm:$0xff]
    %v227 = vld [vmem:[#allocation4 + $0x1a8] sm:$0xff]
    %v228 = vld [vmem:[#allocation4 + $0x1b0] sm:$0xff]
    %v229 = vld [vmem:[#allocation4 + $0x1b8] sm:$0xff]
    %v230 = vld [vmem:[#allocation4 + $0x1c0] sm:$0xff]
    %v231 = vld [vmem:[#allocation4 + $0x1c8] sm:$0xff]
    %v232 = vld [vmem:[#allocation4 + $0x1d0] sm:$0xff]
    %v233 = vld [vmem:[#allocation4 + $0x1d8] sm:$0xff]
    %v234 = vld [vmem:[#allocation4 + $0x1e0] sm:$0xff]
    %v235 = vld [vmem:[#allocation4 + $0x1e8] sm:$0xff]
    %v236 = vld [vmem:[#allocation4 + $0x1f0] sm:$0xff]
    %v237 = vld [vmem:[#allocation4 + $0x1f8] sm:$0xff]
    %v238 = vld [vmem:[%s5] sm:$0x3]
    %v240 = vlaneseq
    %v241 = vshrl.u32 %v240, 7
    %v242 = vsub.s32 0, %v241
    %v243 = vrot.slane %v238, %v242
    %v244 = vlaneseq
    %v245 = vshrl.u32 %v244, 7
    %v246 = vsub.s32 1, %v245
    %v247 = vrot.slane %v238, %v246
    %250 = vmatprep.subr.mxu0 %v175
    %251 = vmatpush1.msra.mxu0 %v174
    %252 = vmatprep.subr.mxu0 %v177
    %253 = vmatpush1.msra.mxu0 %v176
    %254 = vmatprep.subr.mxu0 %v179
    %255 = vmatpush1.msra.mxu0 %v178
    %256 = vmatprep.subr.mxu0 %v181
    %257 = vmatpush1.msra.mxu0 %v180
    %258 = vmatprep.subr.mxu0 %v183
    %259 = vmatpush1.msra.mxu0 %v182
    %260 = vmatprep.subr.mxu0 %v185
    %261 = vmatpush1.msra.mxu0 %v184
    %262 = vmatprep.subr.mxu0 %v187
    %263 = vmatpush1.msra.mxu0 %v186
    %264 = vmatprep.subr.mxu0 %v189
    %265 = vmatpush1.msra.mxu0 %v188
    %266 = vmatprep.subr.mxu0 %v191
    %267 = vmatpush1.msra.mxu0 %v190
    %268 = vmatprep.subr.mxu0 %v193
    %269 = vmatpush1.msra.mxu0 %v192
    %270 = vmatprep.subr.mxu0 %v195
    %271 = vmatpush1.msra.mxu0 %v194
    %272 = vmatprep.subr.mxu0 %v197
    %273 = vmatpush1.msra.mxu0 %v196
    %274 = vmatprep.subr.mxu0 %v199
    %275 = vmatpush1.msra.mxu0 %v198
    %276 = vmatprep.subr.mxu0 %v201
    %277 = vmatpush1.msra.mxu0 %v200
    %278 = vmatprep.subr.mxu0 %v203
    %279 = vmatpush1.msra.mxu0 %v202
    %280 = vmatprep.subr.mxu0 %v205
    %281 = vmatpush1.msra.mxu0 %v204
    %282 = vmatprep.subr.mxu0 %v207
    %283 = vmatpush1.msra.mxu0 %v206
    %284 = vmatprep.subr.mxu0 %v209
    %285 = vmatpush1.msra.mxu0 %v208
    %286 = vmatprep.subr.mxu0 %v211
    %287 = vmatpush1.msra.mxu0 %v210
    %288 = vmatprep.subr.mxu0 %v213
    %289 = vmatpush1.msra.mxu0 %v212
    %290 = vmatprep.subr.mxu0 %v215
    %291 = vmatpush1.msra.mxu0 %v214
    %292 = vmatprep.subr.mxu0 %v217
    %293 = vmatpush1.msra.mxu0 %v216
    %294 = vmatprep.subr.mxu0 %v219
    %295 = vmatpush1.msra.mxu0 %v218
    %296 = vmatprep.subr.mxu0 %v221
    %297 = vmatpush1.msra.mxu0 %v220
    %298 = vmatprep.subr.mxu0 %v223
    %299 = vmatpush1.msra.mxu0 %v222
    %300 = vmatprep.subr.mxu0 %v225
    %301 = vmatpush1.msra.mxu0 %v224
    %302 = vmatprep.subr.mxu0 %v227
    %303 = vmatpush1.msra.mxu0 %v226
    %304 = vmatprep.subr.mxu0 %v229
    %305 = vmatpush1.msra.mxu0 %v228
    %306 = vmatprep.subr.mxu0 %v231
    %307 = vmatpush1.msra.mxu0 %v230
    %308 = vmatprep.subr.mxu0 %v233
    %309 = vmatpush1.msra.mxu0 %v232
    %310 = vmatprep.subr.mxu0 %v235
    %311 = vmatpush1.msra.mxu0 %v234
    %312 = vmatprep.subr.mxu0 %v237
    %313 = vmatpush1.msra.mxu0 %v236
    %314 = vmatprep.mubr.f32.mxu0 %v173
    %315 = vmatmul.mubr.f32.gmra.mrb[0].mxu0 %v172
    %v316 = vpop.f32.mrb[0].mxu0
    %v317 = vadd.f32 %v243, %v316
    %v318 = vpop.f32.mrb[0].mxu0
    %v319 = vadd.f32 %v247, %v318
    %320 = vdwg.mxu0
    %v321 = vmax.f32 %v319, 0.0
    %v322 = vld [vmem:[#allocation6] sm:$0xff]
    %v323 = vld [vmem:[#allocation6 + $0x8] sm:$0xff]
    %v324 = vld [vmem:[#allocation6 + $0x10] sm:$0xff]
    %v325 = vld [vmem:[#allocation6 + $0x18] sm:$0xff]
    %v326 = vld [vmem:[#allocation6 + $0x20] sm:$0xff]
    %v327 = vld [vmem:[#allocation6 + $0x28] sm:$0xff]
    %v328 = vld [vmem:[#allocation6 + $0x30] sm:$0xff]
    %v329 = vld [vmem:[#allocation6 + $0x38] sm:$0xff]
    %v330 = vld [vmem:[#allocation6 + $0x40] sm:$0xff]
    %v331 = vld [vmem:[#allocation6 + $0x48] sm:$0xff]
    %v332 = vld [vmem:[#allocation6 + $0x50] sm:$0xff]
    %v333 = vld [vmem:[#allocation6 + $0x58] sm:$0xff]
    %v334 = vld [vmem:[#allocation6 + $0x60] sm:$0xff]
    %v335 = vld [vmem:[#allocation6 + $0x68] sm:$0xff]
    %v336 = vld [vmem:[#allocation6 + $0x70] sm:$0xff]
    %v337 = vld [vmem:[#allocation6 + $0x78] sm:$0xff]
    %v338 = vld [vmem:[%s7] sm:$0x1]
    %v340 = vlaneseq
    %v341 = vshrl.u32 %v340, 7
    %v342 = vsub.s32 0, %v341
    %v343 = vrot.slane %v338, %v342
    %345 = vmatprep.subr.mxu0 0.0
    %346 = vmatpush1.msra.mxu0 %v322
    %347 = vmatprep.subr.mxu0 0.0
    %348 = vmatpush1.msra.mxu0 %v323
    %349 = vmatprep.subr.mxu0 0.0
    %350 = vmatpush1.msra.mxu0 %v324
    %351 = vmatprep.subr.mxu0 0.0
    %352 = vmatpush1.msra.mxu0 %v325
    %353 = vmatprep.subr.mxu0 0.0
    %354 = vmatpush1.msra.mxu0 %v326
    %355 = vmatprep.subr.mxu0 0.0
    %356 = vmatpush1.msra.mxu0 %v327
    %357 = vmatprep.subr.mxu0 0.0
    %358 = vmatpush1.msra.mxu0 %v328
    %359 = vmatprep.subr.mxu0 0.0
    %360 = vmatpush1.msra.mxu0 %v329
    %361 = vmatprep.subr.mxu0 0.0
    %362 = vmatpush1.msra.mxu0 %v330
    %363 = vmatprep.subr.mxu0 0.0
    %364 = vmatpush1.msra.mxu0 %v331
    %365 = vmatprep.subr.mxu0 0.0
    %366 = vmatpush1.msra.mxu0 %v332
    %367 = vmatprep.subr.mxu0 0.0
    %368 = vmatpush1.msra.mxu0 %v333
    %369 = vmatprep.subr.mxu0 0.0
    %370 = vmatpush1.msra.mxu0 %v334
    %371 = vmatprep.subr.mxu0 0.0
    %372 = vmatpush1.msra.mxu0 %v335
    %373 = vmatprep.subr.mxu0 0.0
    %374 = vmatpush1.msra.mxu0 %v336
    %375 = vmatprep.subr.mxu0 0.0
    %376 = vmatpush1.msra.mxu0 %v337
    %377 = vmatprep.subr.mxu0 0.0
    %378 = vmatpush1.msra.mxu0 0.0
    %379 = vmatprep.subr.mxu0 0.0
    %380 = vmatpush1.msra.mxu0 0.0
    %381 = vmatprep.subr.mxu0 0.0
    %382 = vmatpush1.msra.mxu0 0.0
    %383 = vmatprep.subr.mxu0 0.0
    %384 = vmatpush1.msra.mxu0 0.0
    %385 = vmatprep.subr.mxu0 0.0
    %386 = vmatpush1.msra.mxu0 0.0
    %387 = vmatprep.subr.mxu0 0.0
    %388 = vmatpush1.msra.mxu0 0.0
    %389 = vmatprep.subr.mxu0 0.0
    %390 = vmatpush1.msra.mxu0 0.0
    %391 = vmatprep.subr.mxu0 0.0
    %392 = vmatpush1.msra.mxu0 0.0
    %393 = vmatprep.subr.mxu0 0.0
    %394 = vmatpush1.msra.mxu0 0.0
    %395 = vmatprep.subr.mxu0 0.0
    %396 = vmatpush1.msra.mxu0 0.0
    %397 = vmatprep.subr.mxu0 0.0
    %398 = vmatpush1.msra.mxu0 0.0
    %399 = vmatprep.subr.mxu0 0.0
    %400 = vmatpush1.msra.mxu0 0.0
    %401 = vmatprep.subr.mxu0 0.0
    %402 = vmatpush1.msra.mxu0 0.0
    %403 = vmatprep.subr.mxu0 0.0
    %404 = vmatpush1.msra.mxu0 0.0
    %405 = vmatprep.subr.mxu0 0.0
    %406 = vmatpush1.msra.mxu0 0.0
    %407 = vmatprep.subr.mxu0 0.0
    %408 = vmatpush1.msra.mxu0 0.0
    %409 = vmatprep.mubr.f32.mxu0 0.0
    %410 = vmatmul.mubr.f32.gmra.mrb[0].mxu0 %v321
    %v411 = vpop.f32.mrb[0].mxu0
    %v412 = vadd.f32 %v343, %v411
    %v413 = vpop.f32.mrb[0].mxu0
    %414 = vdwg.mxu0
    %vm415 = vcmp.lt.s32.totalorder %v71, 5
    %v416 = vsub.f32 0.0, %v317
    %v417 = vmul.f32 %v416, 1.442695
    %v418 = vpow.pop %v417
    %v419 = vadd.f32 %v418, 1.0
    %v420 = vrcp.pop %v419
    %v421 = vmul.f32 1.0, %v420
    %v422 = vsel %vm415, %v421, 0.0
    %423 = vadd.xlane.f32.xlu0 %v422
    %v424 = vpop.xlane.xlu0 %423
    %v425 = vmax.f32 %v424, 1e-30
    %v426 = vmax.f32 %v422, 1e-30
    %v427 = vlog2.pop %v426
    %v428 = vmul.f32 %v427, 0.6931472
    %v429 = vlog2.pop %v425
    %v430 = vmul.f32 %v429, 0.6931472
    %v431 = vsub.f32 %v428, %v430
    %v432 = vld [vmem:[%s1] sm:$0xff]
    %433 = vset.pattern.permute.xlu0 0
    %434 = vperm.xlu0 %433, %v432
    %v435 = vpop.permute.xlu0 %434
    %vm436 = vcmp.eq.s32.totalorder %v71, %v435
    %v437 = vsel %vm436, %v431, 0.0
    %438 = vadd.xlane.f32.xlu0 %v437
    %v439 = vpop.xlane.xlu0 %438
    %v440 = vrcp.pop %v425
    %v441 = vmul.f32 %v422, %v440
    %v442 = vmul.f32 %v441, %v431
    %443 = vadd.xlane.f32.xlu0 %v442
    %v444 = vpop.xlane.xlu0 %443
    %v445 = vsub.f32 0.0, %v444
    %vm446 = vcmp.eq.s32.totalorder %v71, 8
    %v447 = vsel %vm446, 1, 0
    %v448 = vcvt.s32.f32 %v447
    %vm449 = vcmp.eq.s32.totalorder %v71, 9
    %v450 = vsel %vm449, 1, 0
    %v451 = vcvt.s32.f32 %v450
    %v452 = vmul.f32 %v439, %v448
    %v453 = vadd.f32 %v422, %v452
    %v454 = vmul.f32 %v445, %v451
    %v455 = vadd.f32 %v453, %v454
    %v456 = vadd.f32 %v455, %v412
    %457 = vst [vmem:[%s8] sm:$0xff] %v456
    // Predicated region
    $region46: #{_evaluate_jit.1} parent=1 // pred_check
      _
    $region47: #{_evaluate_jit.1} parent=1 // pred_check_branch
      %459 = sbr.rel (0) target = $region49
    $region48: #{_evaluate_jit.1} parent=1 // pred_region
      _
    $region49: #{_evaluate_jit.1} parent=1 // pred_fallthru
      _
    // Predicated region
    $region50: #{_evaluate_jit.1} parent=1 // pred_check
      _
    $region51: #{_evaluate_jit.1} parent=1 // pred_check_branch
      %461 = sbr.rel (0) target = $region53
    $region52: #{_evaluate_jit.1} parent=1 // pred_region
      _
    $region53: #{_evaluate_jit.1} parent=1 // pred_fallthru
      _
    %462 = vsyncpa [#allocation3], 1
    %463 = vsyncpa [#allocation5], 1

</llo_original>
